<compile_context>
chip_gen: v5e
topology: v5e:2x2
jax: 0.10.0
libtpu: 0.0.40
codegen_flags: <defaults>
</compile_context>

<pallas_src>
import functools

import jax
import jax.numpy as jnp
import numpy as np
from jax.experimental import pallas as pl
from jax.experimental.pallas import tpu as pltpu

# ---- model configuration (small, consistent with the module) ----
D_IN = 16
D_LAYERS = [32, 32]
D_OUT = 8
NUM_FEAT = 2
CLASSES = (2, 2)
TASK = "classification"   # softmax over the batch dim for the last column
BATCH = 8
LANE = 128


def _round_up(v, m):
    return ((v + m - 1) // m) * m


# --------------------------------------------------------------------------
# kernel
# --------------------------------------------------------------------------
def mlp_kernel(x_ref, w_ref, b_ref, out_ref, *, n_layers, d_out, num_feat,
               classes, task):
    """x_ref: (B, d_pad) f32 zero-padded input.
       w_ref: (n_layers+1, d_pad, d_pad) pre-transposed, zero-padded weights.
       b_ref: (n_layers+1, d_pad) zero-padded biases.
       out_ref: (B, d_pad) lane-dense output (caller slices [:, :d_out])."""
    h = x_ref[...]                                          # (B, d_pad), f32

    # ---- hidden blocks: Linear -> ReLU (Dropout == identity at inference) ----
    # TODO(synk): dropout is treated as identity (eval semantics); not a
    # training kernel.
    for i in range(n_layers):
        w = w_ref[i]                                        # (d_pad, d_pad)
        b = b_ref[i:i + 1, :]                               # (1, d_pad)
        h = jnp.maximum(
            jnp.dot(h, w, preferred_element_type=jnp.float32) + b, 0.0)

    # ---- head ----
    y = (jnp.dot(h, w_ref[n_layers], preferred_element_type=jnp.float32)
         + b_ref[n_layers:n_layers + 1, :])                 # (B, d_pad)

    B, d_pad = y.shape
    col = jax.lax.broadcasted_iota(jnp.int32, (B, d_pad), 1)

    # numeric features: passthrough; padding / class columns start at zero
    res = jnp.where(col < num_feat, y, 0.0)

    # per-class softmax over the feature (column) axis, mask-based (no narrow
    # lane slices / concatenates).  Large finite mask value instead of -inf.
    cum = num_feat
    for val in classes:
        m = (col >= cum) & (col < cum + val)
        masked = jnp.where(m, y, -1e30)
        mx = jnp.max(masked, axis=1, keepdims=True)
        e = jnp.where(m, jnp.exp(masked - mx), 0.0)
        denom = jnp.sum(e, axis=1, keepdims=True)
        res = jnp.where(m, e * pl.reciprocal(denom, approx=False), res)
        cum += val

    # last real column: passthrough (regression) or softmax over the batch dim
    if task == "regression":
        last = y
    else:
        mx0 = jnp.max(y, axis=0, keepdims=True)             # (1, d_pad)
        e0 = jnp.exp(y - mx0)
        inv = pl.reciprocal(jnp.sum(e0, axis=0, keepdims=True), approx=False)
        last = e0 * inv
    res = jnp.where(col == d_out - 1, last, res)

    out_ref[...] = res.astype(out_ref.dtype)


# --------------------------------------------------------------------------
# one-time host-side parameter preparation (hoisted out of the hot path)
# --------------------------------------------------------------------------
def prepare_params(params, d_pad=LANE):
    """Pack PyTorch-layout params into one weight slab + one bias slab.

    params: {"ws": [W_i (d_out_i, d_in_i)], "bs": [b_i (d_out_i,)],
             "w_head": (d_out, d_last), "b_head": (d_out,)}
    Returns (w_slab (L, d_pad, d_pad), b_slab (L, d_pad)) with each layer's
    transposed weight (x @ W.T layout) zero-padded into a d_pad x d_pad tile.
    """
    ws = list(params["ws"]) + [params["w_head"]]
    bs = list(params["bs"]) + [params["b_head"]]
    n = len(ws)
    w_slab = np.zeros((n, d_pad, d_pad), np.float32)
    b_slab = np.zeros((n, d_pad), np.float32)
    for i, (w, b) in enumerate(zip(ws, bs)):
        w = np.asarray(w, np.float32)                       # (d_out_i, d_in_i)
        b = np.asarray(b, np.float32)
        w_slab[i, : w.shape[1], : w.shape[0]] = w.T         # pre-transposed
        b_slab[i, : b.shape[0]] = b
    return jnp.asarray(w_slab), jnp.asarray(b_slab)


# --------------------------------------------------------------------------
# jitted forward wrapper
# --------------------------------------------------------------------------
@functools.partial(jax.jit,
                   static_argnames=("d_in", "d_out", "num_feat", "classes",
                                    "task"))
def mlp_forward(x, w_slab, b_slab, *, d_in, d_out, num_feat, classes, task):
    B = x.shape[0]
    n_layers = w_slab.shape[0] - 1
    d_pad = w_slab.shape[-1]

    # lane-dense padded input (fused into the jitted graph)
    x_pad = jnp.zeros((B, d_pad), jnp.float32).at[:, :d_in].set(
        x.astype(jnp.float32))

    kernel = functools.partial(
        mlp_kernel, n_layers=n_layers, d_out=d_out, num_feat=num_feat,
        classes=tuple(classes), task=task)

    in_specs = [
        pl.BlockSpec((B, d_pad), lambda i: (0, 0)),                      # x
        pl.BlockSpec((n_layers + 1, d_pad, d_pad), lambda i: (0, 0, 0)), # w slab
        pl.BlockSpec((n_layers + 1, d_pad), lambda i: (0, 0)),           # b slab
    ]
    out_spec = pl.BlockSpec((B, d_pad), lambda i: (0, 0))

    cost = pl.CostEstimate(
        flops=2 * B * d_pad * d_pad * (n_layers + 1),
        transcendentals=B * d_pad * (len(classes) + 1),
        bytes_accessed=4 * (x_pad.size + w_slab.size + b_slab.size + B * d_pad),
    )

    out_pad = pl.pallas_call(
        kernel,
        out_shape=jax.ShapeDtypeStruct((B, d_pad), jnp.float32),
        grid=(1,),                       # whole batch in one step (batch-dim softmax)
        in_specs=in_specs,
        out_specs=out_spec,
        compiler_params=pltpu.CompilerParams(
            dimension_semantics=("arbitrary",)),
        cost_estimate=cost,
    )(x_pad, w_slab, b_slab)

    return out_pad[:, :d_out]


# --------------------------------------------------------------------------
# pure-JAX reference (mirrors the PyTorch forward)
# --------------------------------------------------------------------------
def reference(x, params, *, num_feat, classes, task):
    h = x.astype(jnp.float32)
    for w, b in zip(params["ws"], params["bs"]):
        h = jnp.maximum(h @ w.T + b, 0.0)
    y = h @ params["w_head"].T + params["b_head"]

    res = jnp.zeros_like(y)
    cum = num_feat
    res = res.at[:, :cum].set(y[:, :cum])
    if sum(classes) > 0:
        for val in classes:
            sl = y[:, cum:cum + val]
            res = res.at[:, cum:cum + val].set(
                jnp.exp(jax.nn.log_softmax(sl, axis=1)))
            cum += val
    if task == "regression":
        res = res.at[:, -1].set(y[:, -1])
    else:
        res = res.at[:, -1].set(jnp.exp(jax.nn.log_softmax(y[:, -1], axis=0)))
    return res


def init_params(key, d_in, d_layers, d_out):
    ks = jax.random.split(key, 2 * (len(d_layers) + 1))
    ws, bs = [], []
    prev = d_in
    scale = 0.2
    ki = 0
    for d in d_layers:
        ws.append(scale * jax.random.normal(ks[ki], (d, prev), jnp.float32)); ki += 1
        bs.append(scale * jax.random.normal(ks[ki], (d,), jnp.float32)); ki += 1
        prev = d
    w_head = scale * jax.random.normal(ks[ki], (d_out, prev), jnp.float32); ki += 1
    b_head = scale * jax.random.normal(ks[ki], (d_out,), jnp.float32)
    return {"ws": ws, "bs": bs, "w_head": w_head, "b_head": b_head}


if __name__ == "__main__":
    key = jax.random.PRNGKey(0)
    k_x, k_p = jax.random.split(key)

    x = jax.random.normal(k_x, (BATCH, D_IN), jnp.float32)
    params = init_params(k_p, D_IN, D_LAYERS, D_OUT)

    # one-time param prep (hoisted out of the per-call hot path)
    d_pad = _round_up(max([D_IN] + list(D_LAYERS) + [D_OUT]), LANE)
    w_slab, b_slab = prepare_params(params, d_pad=d_pad)

    out = mlp_forward(x, w_slab, b_slab, d_in=D_IN, d_out=D_OUT,
                      num_feat=NUM_FEAT, classes=CLASSES, task=TASK)
    out = jax.block_until_ready(out)

    ref = jax.block_until_ready(
        reference(x, params, num_feat=NUM_FEAT, classes=CLASSES, task=TASK))
    np.testing.assert_allclose(np.asarray(out), np.asarray(ref),
                               rtol=1e-5, atol=1e-5)

    print("KERNEL_OK")
</pallas_src>

<mosaic_0001>
module attributes {stable_mosaic.version = 11 : i64} {
  func.func @mlp_kernel(%arg0: i32, %arg1: memref<8x128xf32, #tpu.memory_space<vmem>>, %arg2: memref<3x128x128xf32, #tpu.memory_space<vmem>>, %arg3: memref<3x128xf32, #tpu.memory_space<vmem>>, %arg4: memref<8x128xf32, #tpu.memory_space<vmem>>) attributes {dimension_semantics = [#tpu.dimension_semantics<arbitrary>], iteration_bounds = array<i64: 1>, scalar_prefetch = 0 : i64, scratch_operands = 0 : i64, tpu.core_type = #tpu.core_type<tc>, window_params = [{pipeline_mode = #tpu.pipeline_mode<synchronous>, transform_indices = @transform_0, window_bounds = array<i64: 8, 128>}, {pipeline_mode = #tpu.pipeline_mode<synchronous>, transform_indices = @transform_1, window_bounds = array<i64: 3, 128, 128>}, {pipeline_mode = #tpu.pipeline_mode<synchronous>, transform_indices = @transform_2, window_bounds = array<i64: 3, 128>}, {pipeline_mode = #tpu.pipeline_mode<synchronous>, transform_indices = @transform_3, window_bounds = array<i64: 8, 128>}]} {
    %c0 = arith.constant 0 : index
    %c0_0 = arith.constant 0 : index
    %0 = vector.load %arg1[%c0, %c0_0] : memref<8x128xf32, #tpu.memory_space<vmem>>, vector<8x128xf32>
    %c0_1 = arith.constant 0 : index
    %c0_2 = arith.constant 0 : index
    %c0_3 = arith.constant 0 : index
    %1 = vector.load %arg2[%c0_1, %c0_2, %c0_3] : memref<3x128x128xf32, #tpu.memory_space<vmem>>, vector<1x128x128xf32>
    %2 = vector.shape_cast %1 : vector<1x128x128xf32> to vector<128x128xf32>
    %c0_4 = arith.constant 0 : index
    %c0_5 = arith.constant 0 : index
    %3 = vector.load %arg3[%c0_4, %c0_5] : memref<3x128xf32, #tpu.memory_space<vmem>>, vector<1x128xf32>
    %cst = arith.constant dense<0.000000e+00> : vector<8x128xf32>
    %4 = tpu.matmul %0, %2, %cst {dimension_numbers = #tpu.dot_dimension_numbers<[1], [0], [0], [1], [0, 0, 1, 1], [], []>} : vector<8x128xf32>, vector<128x128xf32>, vector<8x128xf32> -> vector<8x128xf32>
    %5 = vector.broadcast %3 : vector<1x128xf32> to vector<8x128xf32>
    %6 = arith.addf %4, %5 : vector<8x128xf32>
    %cst_6 = arith.constant 0.000000e+00 : f32
    %7 = vector.broadcast %cst_6 : f32 to vector<8x128xf32>
    %8 = arith.maximumf %6, %7 : vector<8x128xf32>
    %c1 = arith.constant 1 : index
    %c0_7 = arith.constant 0 : index
    %c0_8 = arith.constant 0 : index
    %9 = vector.load %arg2[%c1, %c0_7, %c0_8] : memref<3x128x128xf32, #tpu.memory_space<vmem>>, vector<1x128x128xf32>
    %10 = vector.shape_cast %9 : vector<1x128x128xf32> to vector<128x128xf32>
    %c1_9 = arith.constant 1 : index
    %c0_10 = arith.constant 0 : index
    %11 = vector.load %arg3[%c1_9, %c0_10] : memref<3x128xf32, #tpu.memory_space<vmem>>, vector<1x128xf32>
    %cst_11 = arith.constant dense<0.000000e+00> : vector<8x128xf32>
    %12 = tpu.matmul %8, %10, %cst_11 {dimension_numbers = #tpu.dot_dimension_numbers<[1], [0], [0], [1], [0, 0, 1, 1], [], []>} : vector<8x128xf32>, vector<128x128xf32>, vector<8x128xf32> -> vector<8x128xf32>
    %13 = vector.broadcast %11 : vector<1x128xf32> to vector<8x128xf32>
    %14 = arith.addf %12, %13 : vector<8x128xf32>
    %cst_12 = arith.constant 0.000000e+00 : f32
    %15 = vector.broadcast %cst_12 : f32 to vector<8x128xf32>
    %16 = arith.maximumf %14, %15 : vector<8x128xf32>
    %c2 = arith.constant 2 : index
    %c0_13 = arith.constant 0 : index
    %c0_14 = arith.constant 0 : index
    %17 = vector.load %arg2[%c2, %c0_13, %c0_14] : memref<3x128x128xf32, #tpu.memory_space<vmem>>, vector<1x128x128xf32>
    %18 = vector.shape_cast %17 : vector<1x128x128xf32> to vector<128x128xf32>
    %cst_15 = arith.constant dense<0.000000e+00> : vector<8x128xf32>
    %19 = tpu.matmul %16, %18, %cst_15 {dimension_numbers = #tpu.dot_dimension_numbers<[1], [0], [0], [1], [0, 0, 1, 1], [], []>} : vector<8x128xf32>, vector<128x128xf32>, vector<8x128xf32> -> vector<8x128xf32>
    %c2_16 = arith.constant 2 : index
    %c0_17 = arith.constant 0 : index
    %20 = vector.load %arg3[%c2_16, %c0_17] : memref<3x128xf32, #tpu.memory_space<vmem>>, vector<1x128xf32>
    %21 = vector.broadcast %20 : vector<1x128xf32> to vector<8x128xf32>
    %22 = arith.addf %19, %21 : vector<8x128xf32>
    %23 = tpu.iota {dimensions = array<i32: 1>} : vector<8x128xi32>
    %c2_i32 = arith.constant 2 : i32
    %24 = vector.broadcast %c2_i32 : i32 to vector<8x128xi32>
    %25 = arith.cmpi slt, %23, %24 : vector<8x128xi32>
    %cst_18 = arith.constant 0.000000e+00 : f32
    %26 = vector.broadcast %cst_18 : f32 to vector<8x128xf32>
    %27 = arith.select %25, %22, %26 : vector<8x128xi1>, vector<8x128xf32>
    %c2_i32_19 = arith.constant 2 : i32
    %28 = vector.broadcast %c2_i32_19 : i32 to vector<8x128xi32>
    %29 = arith.cmpi sge, %23, %28 : vector<8x128xi32>
    %c4_i32 = arith.constant 4 : i32
    %30 = vector.broadcast %c4_i32 : i32 to vector<8x128xi32>
    %31 = arith.cmpi slt, %23, %30 : vector<8x128xi32>
    %32 = arith.andi %29, %31 : vector<8x128xi1>
    %cst_20 = arith.constant -1.000000e+30 : f32
    %33 = vector.broadcast %cst_20 : f32 to vector<8x128xf32>
    %34 = arith.select %32, %22, %33 : vector<8x128xi1>, vector<8x128xf32>
    %cst_21 = arith.constant dense<0xFF800000> : vector<8xf32>
    %35 = vector.multi_reduction <maximumf>, %34, %cst_21 [1] : vector<8x128xf32> to vector<8xf32>
    %36 = vector.shape_cast %35 : vector<8xf32> to vector<8x1xf32>
    %37 = vector.broadcast %36 : vector<8x1xf32> to vector<8x128xf32>
    %38 = arith.subf %34, %37 : vector<8x128xf32>
    %39 = math.exp %38 : vector<8x128xf32>
    %cst_22 = arith.constant 0.000000e+00 : f32
    %40 = vector.broadcast %cst_22 : f32 to vector<8x128xf32>
    %41 = arith.select %32, %39, %40 : vector<8x128xi1>, vector<8x128xf32>
    %cst_23 = arith.constant dense<0.000000e+00> : vector<8xf32>
    %42 = vector.multi_reduction <add>, %41, %cst_23 [1] : vector<8x128xf32> to vector<8xf32>
    %43 = vector.shape_cast %42 : vector<8xf32> to vector<8x1xf32>
    %44 = tpu.reciprocal %43 : vector<8x1xf32> -> vector<8x1xf32>
    %45 = vector.broadcast %44 : vector<8x1xf32> to vector<8x128xf32>
    %46 = arith.mulf %41, %45 : vector<8x128xf32>
    %47 = arith.select %32, %46, %27 : vector<8x128xi1>, vector<8x128xf32>
    %c4_i32_24 = arith.constant 4 : i32
    %48 = vector.broadcast %c4_i32_24 : i32 to vector<8x128xi32>
    %49 = arith.cmpi sge, %23, %48 : vector<8x128xi32>
    %c6_i32 = arith.constant 6 : i32
    %50 = vector.broadcast %c6_i32 : i32 to vector<8x128xi32>
    %51 = arith.cmpi slt, %23, %50 : vector<8x128xi32>
    %52 = arith.andi %49, %51 : vector<8x128xi1>
    %cst_25 = arith.constant -1.000000e+30 : f32
    %53 = vector.broadcast %cst_25 : f32 to vector<8x128xf32>
    %54 = arith.select %52, %22, %53 : vector<8x128xi1>, vector<8x128xf32>
    %cst_26 = arith.constant dense<0xFF800000> : vector<8xf32>
    %55 = vector.multi_reduction <maximumf>, %54, %cst_26 [1] : vector<8x128xf32> to vector<8xf32>
    %56 = vector.shape_cast %55 : vector<8xf32> to vector<8x1xf32>
    %57 = vector.broadcast %56 : vector<8x1xf32> to vector<8x128xf32>
    %58 = arith.subf %54, %57 : vector<8x128xf32>
    %59 = math.exp %58 : vector<8x128xf32>
    %cst_27 = arith.constant 0.000000e+00 : f32
    %60 = vector.broadcast %cst_27 : f32 to vector<8x128xf32>
    %61 = arith.select %52, %59, %60 : vector<8x128xi1>, vector<8x128xf32>
    %cst_28 = arith.constant dense<0.000000e+00> : vector<8xf32>
    %62 = vector.multi_reduction <add>, %61, %cst_28 [1] : vector<8x128xf32> to vector<8xf32>
    %63 = vector.shape_cast %62 : vector<8xf32> to vector<8x1xf32>
    %64 = tpu.reciprocal %63 : vector<8x1xf32> -> vector<8x1xf32>
    %65 = vector.broadcast %64 : vector<8x1xf32> to vector<8x128xf32>
    %66 = arith.mulf %61, %65 : vector<8x128xf32>
    %67 = arith.select %52, %66, %47 : vector<8x128xi1>, vector<8x128xf32>
    %cst_29 = arith.constant dense<0xFF800000> : vector<128xf32>
    %68 = vector.multi_reduction <maximumf>, %22, %cst_29 [0] : vector<8x128xf32> to vector<128xf32>
    %69 = vector.shape_cast %68 : vector<128xf32> to vector<1x128xf32>
    %70 = vector.broadcast %69 : vector<1x128xf32> to vector<8x128xf32>
    %71 = arith.subf %22, %70 : vector<8x128xf32>
    %72 = math.exp %71 : vector<8x128xf32>
    %cst_30 = arith.constant dense<0.000000e+00> : vector<128xf32>
    %73 = vector.multi_reduction <add>, %72, %cst_30 [0] : vector<8x128xf32> to vector<128xf32>
    %74 = vector.shape_cast %73 : vector<128xf32> to vector<1x128xf32>
    %75 = tpu.reciprocal %74 : vector<1x128xf32> -> vector<1x128xf32>
    %76 = vector.broadcast %75 : vector<1x128xf32> to vector<8x128xf32>
    %77 = arith.mulf %72, %76 : vector<8x128xf32>
    %c7_i32 = arith.constant 7 : i32
    %78 = vector.broadcast %c7_i32 : i32 to vector<8x128xi32>
    %79 = arith.cmpi eq, %23, %78 : vector<8x128xi32>
    %80 = arith.select %79, %77, %67 : vector<8x128xi1>, vector<8x128xf32>
    %c0_31 = arith.constant 0 : index
    %c0_32 = arith.constant 0 : index
    %81 = vector.load %arg4[%c0_31, %c0_32] : memref<8x128xf32, #tpu.memory_space<vmem>>, vector<8x128xf32>
    tpu.vector_store %arg4[%c0_31, %c0_32], %80 {strides = array<i32>} : memref<8x128xf32, #tpu.memory_space<vmem>>, vector<8x128xf32>,
    return
  }
  func.func @transform_0(%arg0: i32) -> (i32, i32) {
    %c0_i32 = arith.constant 0 : i32
    %c0_i32_0 = arith.constant 0 : i32
    %c0_i32_1 = arith.constant 0 : i32
    return %c0_i32, %c0_i32_0 : i32, i32
  }
  func.func @transform_1(%arg0: i32) -> (i32, i32, i32) {
    %c0_i32 = arith.constant 0 : i32
    %c0_i32_0 = arith.constant 0 : i32
    %c0_i32_1 = arith.constant 0 : i32
    %c0_i32_2 = arith.constant 0 : i32
    return %c0_i32, %c0_i32_0, %c0_i32_1 : i32, i32, i32
  }
  func.func @transform_2(%arg0: i32) -> (i32, i32) {
    %c0_i32 = arith.constant 0 : i32
    %c0_i32_0 = arith.constant 0 : i32
    %c0_i32_1 = arith.constant 0 : i32
    return %c0_i32, %c0_i32_0 : i32, i32
  }
  func.func @transform_3(%arg0: i32) -> (i32, i32) {
    %c0_i32 = arith.constant 0 : i32
    %c0_i32_0 = arith.constant 0 : i32
    %c0_i32_1 = arith.constant 0 : i32
    return %c0_i32, %c0_i32_0 : i32, i32
  }
}

</mosaic_0001>

<llo_original>
// kernel: mlp_forward.1
$region0: #{mlp_forward.1}
  #allocation0 [shape = 'u32[]', space=smem, size = 0x4, offset = 0x4, fixed_abs, tag = 'smem constant byte address 0x4 - core index']
  #allocation1 [shape = 'u32[72,128]{1,0:T(1,128)}', space=vmem, size = 0x9000, scoped, tag = 'internal scratch']
  %s0 = inlined_call_operand.vmem [shape: f32[8,128], index: 0, kind: input, shape index: {}]
  %s1 = inlined_call_operand.hbm [shape: f32[3,128,128], index: 1, kind: input, shape index: {}]
  %s2 = inlined_call_operand.vmem [shape: f32[3,128], index: 2, kind: input, shape index: {}]
  %s3 = inlined_call_operand.hbm [shape: f32[8,128], index: 3, kind: output, shape index: {}]
  %s4 = sld [smem:[#allocation0]]
  $region26: #{mlp_forward.1} parent=0
    _
  %s6 = ssub.s32 1, %s4
  %s7 = scalar_select 0, %s6, %s4
  $region1: #{mlp_forward.1} parent=0
    #allocation2 [shape = 'u8[196608]{0}', space=vmem, size = 0x30000, scoped, tag = 'input window, operand 1, single buffered']
    #allocation3 [shape = 's32[1]{0}', space=sflag, size = 0x4, scoped, tag = 'scoped memory for mlp_forward.1']
    #allocation4 [shape = 's32[1]{0}', space=sflag, size = 0x4, scoped, tag = 'scoped memory for mlp_forward.1']
    #allocation5 [shape = 'u8[4096]{0}', space=vmem, size = 0x1000, scoped, tag = 'output window, operand 0, single buffered']
    %8 = vsyncpa [#allocation3], 0
    %9 = vsyncpa [#allocation4], 0
    // Predicated region
    $region2: #{mlp_forward.1} parent=1 // pred_check
      _
    $region3: #{mlp_forward.1} parent=1 // pred_check_branch
      %11 = sbr.rel (0) target = $region5
    $region4: #{mlp_forward.1} parent=1 // pred_region
      _
    $region5: #{mlp_forward.1} parent=1 // pred_fallthru
      _
    // Predicated region
    $region6: #{mlp_forward.1} parent=1 // pred_check
      _
    $region7: #{mlp_forward.1} parent=1 // pred_check_branch
      %13 = sbr.rel (0) target = $region9
    $region8: #{mlp_forward.1} parent=1 // pred_region
      %15 = vsyncadd [#allocation3], 0
      %s16 = sshll.u32 %s1, 4
      %s17 = int_to_ptr.hbm [resolvable:$true] %s16
      %s18 = sshll.u32 [#allocation2], 4
      %s19 = int_to_ptr.vmem [resolvable:$true] %s18
      %24 = dma.hbm_to_vmem [thread:$0]  %s17, 6144, %s19, [#allocation3], 128, 128, 8
    $region9: #{mlp_forward.1} parent=1 // pred_fallthru
      _
    // Predicated region
    $region10: #{mlp_forward.1} parent=1 // pred_check
      _
    $region11: #{mlp_forward.1} parent=1 // pred_check_branch
      %26 = sbr.rel (0) target = $region13
    $region12: #{mlp_forward.1} parent=1 // pred_region
      _
    $region13: #{mlp_forward.1} parent=1 // pred_fallthru
      _
    // Predicated region
    $region14: #{mlp_forward.1} parent=1 // pred_check
      _
    $region15: #{mlp_forward.1} parent=1 // pred_check_branch
      %28 = sbr.rel (0) target = $region17
    $region16: #{mlp_forward.1} parent=1 // pred_region
      %30 = dma.done [#allocation3], 6144
    $region17: #{mlp_forward.1} parent=1 // pred_fallthru
      _
    %v31 = vld [vmem:[%s0] sm:$0xff]
    %v32 = vld [vmem:[#allocation2] sm:$0xff]
    %v33 = vld [vmem:[#allocation2 + $0x8] sm:$0xff]
    %v34 = vld [vmem:[#allocation2 + $0x10] sm:$0xff]
    %v35 = vld [vmem:[#allocation2 + $0x18] sm:$0xff]
    %v36 = vld [vmem:[#allocation2 + $0x20] sm:$0xff]
    %v37 = vld [vmem:[#allocation2 + $0x28] sm:$0xff]
    %v38 = vld [vmem:[#allocation2 + $0x30] sm:$0xff]
    %v39 = vld [vmem:[#allocation2 + $0x38] sm:$0xff]
    %v40 = vld [vmem:[#allocation2 + $0x40] sm:$0xff]
    %v41 = vld [vmem:[#allocation2 + $0x48] sm:$0xff]
    %v42 = vld [vmem:[#allocation2 + $0x50] sm:$0xff]
    %v43 = vld [vmem:[#allocation2 + $0x58] sm:$0xff]
    %v44 = vld [vmem:[#allocation2 + $0x60] sm:$0xff]
    %v45 = vld [vmem:[#allocation2 + $0x68] sm:$0xff]
    %v46 = vld [vmem:[#allocation2 + $0x70] sm:$0xff]
    %v47 = vld [vmem:[#allocation2 + $0x78] sm:$0xff]
    %v48 = vld [vmem:[%s2] sm:$0x1]
    %v49 = vperm.slane %v48, 0
    %50 = vmatpush.msra.mxu0 %v47
    %51 = vmatpush.msra.mxu0 %v46
    %52 = vmatpush.msra.mxu0 %v45
    %53 = vmatpush.msra.mxu0 %v44
    %54 = vmatpush.msra.mxu0 %v43
    %55 = vmatpush.msra.mxu0 %v42
    %56 = vmatpush.msra.mxu0 %v41
    %57 = vmatpush.msra.mxu0 %v40
    %58 = vmatpush.msra.mxu0 %v39
    %59 = vmatpush.msra.mxu0 %v38
    %60 = vmatpush.msra.mxu0 %v37
    %61 = vmatpush.msra.mxu0 %v36
    %62 = vmatpush.msra.mxu0 %v35
    %63 = vmatpush.msra.mxu0 %v34
    %64 = vmatpush.msra.mxu0 %v33
    %65 = vmatpush.msra.mxu0 %v32
    %66 = vmatmul.f32.gmra.mxu0 %v31
    %v67 = vpop.f32.mrf.mxu0
    %v68 = vadd.f32 %v49, %v67
    %69 = vdwg.mxu0
    %v70 = vmax.f32 %v68, 0.0
    %s71 = scalar_lea.vmem [#allocation2], 128
    %v72 = vld [vmem:[%s71] sm:$0xff]
    %v73 = vld [vmem:[%s71 + $0x8] sm:$0xff]
    %v74 = vld [vmem:[%s71 + $0x10] sm:$0xff]
    %v75 = vld [vmem:[%s71 + $0x18] sm:$0xff]
    %v76 = vld [vmem:[%s71 + $0x20] sm:$0xff]
    %v77 = vld [vmem:[%s71 + $0x28] sm:$0xff]
    %v78 = vld [vmem:[%s71 + $0x30] sm:$0xff]
    %v79 = vld [vmem:[%s71 + $0x38] sm:$0xff]
    %v80 = vld [vmem:[%s71 + $0x40] sm:$0xff]
    %v81 = vld [vmem:[%s71 + $0x48] sm:$0xff]
    %v82 = vld [vmem:[%s71 + $0x50] sm:$0xff]
    %v83 = vld [vmem:[%s71 + $0x58] sm:$0xff]
    %v84 = vld [vmem:[%s71 + $0x60] sm:$0xff]
    %v85 = vld [vmem:[%s71 + $0x68] sm:$0xff]
    %v86 = vld [vmem:[%s71 + $0x70] sm:$0xff]
    %v87 = vld [vmem:[%s71 + $0x78] sm:$0xff]
    %v88 = vld [vmem:[%s2 + $0x1] sm:$0x1]
    %v89 = vperm.slane %v88, 0
    %90 = vmatpush.msra.mxu0 %v87
    %91 = vmatpush.msra.mxu0 %v86
    %92 = vmatpush.msra.mxu0 %v85
    %93 = vmatpush.msra.mxu0 %v84
    %94 = vmatpush.msra.mxu0 %v83
    %95 = vmatpush.msra.mxu0 %v82
    %96 = vmatpush.msra.mxu0 %v81
    %97 = vmatpush.msra.mxu0 %v80
    %98 = vmatpush.msra.mxu0 %v79
    %99 = vmatpush.msra.mxu0 %v78
    %100 = vmatpush.msra.mxu0 %v77
    %101 = vmatpush.msra.mxu0 %v76
    %102 = vmatpush.msra.mxu0 %v75
    %103 = vmatpush.msra.mxu0 %v74
    %104 = vmatpush.msra.mxu0 %v73
    %105 = vmatpush.msra.mxu0 %v72
    %106 = vmatmul.f32.gmra.mxu0 %v70
    %v107 = vpop.f32.mrf.mxu0
    %v108 = vadd.f32 %v89, %v107
    %109 = vdwg.mxu0
    %v110 = vmax.f32 %v108, 0.0
    %s111 = scalar_lea.vmem [#allocation2], 256
    %v112 = vld [vmem:[%s111] sm:$0xff]
    %v113 = vld [vmem:[%s111 + $0x8] sm:$0xff]
    %v114 = vld [vmem:[%s111 + $0x10] sm:$0xff]
    %v115 = vld [vmem:[%s111 + $0x18] sm:$0xff]
    %v116 = vld [vmem:[%s111 + $0x20] sm:$0xff]
    %v117 = vld [vmem:[%s111 + $0x28] sm:$0xff]
    %v118 = vld [vmem:[%s111 + $0x30] sm:$0xff]
    %v119 = vld [vmem:[%s111 + $0x38] sm:$0xff]
    %v120 = vld [vmem:[%s111 + $0x40] sm:$0xff]
    %v121 = vld [vmem:[%s111 + $0x48] sm:$0xff]
    %v122 = vld [vmem:[%s111 + $0x50] sm:$0xff]
    %v123 = vld [vmem:[%s111 + $0x58] sm:$0xff]
    %v124 = vld [vmem:[%s111 + $0x60] sm:$0xff]
    %v125 = vld [vmem:[%s111 + $0x68] sm:$0xff]
    %v126 = vld [vmem:[%s111 + $0x70] sm:$0xff]
    %v127 = vld [vmem:[%s111 + $0x78] sm:$0xff]
    %v128 = vld [vmem:[%s2 + $0x2] sm:$0x1]
    %v129 = vperm.slane %v128, 0
    %130 = vmatpush.msra.mxu0 %v127
    %131 = vmatpush.msra.mxu0 %v126
    %132 = vmatpush.msra.mxu0 %v125
    %133 = vmatpush.msra.mxu0 %v124
    %134 = vmatpush.msra.mxu0 %v123
    %135 = vmatpush.msra.mxu0 %v122
    %136 = vmatpush.msra.mxu0 %v121
    %137 = vmatpush.msra.mxu0 %v120
    %138 = vmatpush.msra.mxu0 %v119
    %139 = vmatpush.msra.mxu0 %v118
    %140 = vmatpush.msra.mxu0 %v117
    %141 = vmatpush.msra.mxu0 %v116
    %142 = vmatpush.msra.mxu0 %v115
    %143 = vmatpush.msra.mxu0 %v114
    %144 = vmatpush.msra.mxu0 %v113
    %145 = vmatpush.msra.mxu0 %v112
    %146 = vmatmul.f32.gmra.mxu0 %v110
    %v147 = vpop.f32.mrf.mxu0
    %v148 = vadd.f32 %v129, %v147
    %149 = vdwg.mxu0
    %v150 = vlaneseq
    %v151 = vand.u32 %v150, 127
    %vm152 = vcmp.lt.s32.totalorder %v151, 2
    %v153 = vsel %vm152, %v148, 0.0
    %vm154 = vcmp.ge.s32.totalorder %v151, 2
    %vm155 = vcmp.lt.s32.totalorder %v151, 4
    %vm156 = vmand %vm154, %vm155
    %v157 = vsel %vm156, %v148, -1e+30
    %158 = vmax.xlane.f32.xlu0 %v157
    %v159 = vpop.xlane.xlu0 %158
    %v160 = vsub.f32 %v157, %v159
    %v161 = vmul.f32 %v160, 1.442695
    %v162 = vpow.pop %v161
    %v163 = vsel %vm156, %v162, 0.0
    %164 = vadd.xlane.f32.xlu0 %v163
    %v165 = vpop.xlane.xlu0 %164
    %v166 = vrcp.pop %v165
    %v167 = vmul.f32 %v165, %v166
    %v168 = vsub.f32 1.0, %v167
    %v169 = vmul.f32 %v166, %v168
    %v170 = vadd.f32 %v166, %v169
    %vm171 = vweird.f32 %v165
    %vm172 = vweird.f32 %v166
    %vm173 = vmor %vm171, %vm172
    %v174 = vsel %vm173, %v166, %v170
    %v175 = vand.u32 2147483647, %v165
    %vm176 = vcmp.eq.f32.partialorder %v175, 8.507059e+37
    %v177 = vand.u32 %v165, 2147483648
    %v178 = vor.u32 1.1754944e-38, %v177
    %v179 = vsel %vm176, %v178, %v174
    %v180 = vmul.f32 %v163, %v179
    %v181 = vsel %vm156, %v180, %v153
    %vm182 = vcmp.ge.s32.totalorder %v151, 4
    %vm183 = vcmp.lt.s32.totalorder %v151, 6
    %vm184 = vmand %vm182, %vm183
    %v185 = vsel %vm184, %v148, -1e+30
    %186 = vmax.xlane.f32.xlu0 %v185
    %v187 = vpop.xlane.xlu0 %186
    %v188 = vsub.f32 %v185, %v187
    %v189 = vmul.f32 %v188, 1.442695
    %v190 = vpow.pop %v189
    %v191 = vsel %vm184, %v190, 0.0
    %192 = vadd.xlane.f32.xlu0 %v191
    %v193 = vpop.xlane.xlu0 %192
    %v194 = vrcp.pop %v193
    %v195 = vmul.f32 %v193, %v194
    %v196 = vsub.f32 1.0, %v195
    %v197 = vmul.f32 %v194, %v196
    %v198 = vadd.f32 %v194, %v197
    %vm199 = vweird.f32 %v193
    %vm200 = vweird.f32 %v194
    %vm201 = vmor %vm199, %vm200
    %v202 = vsel %vm201, %v194, %v198
    %v203 = vand.u32 2147483647, %v193
    %vm204 = vcmp.eq.f32.partialorder %v203, 8.507059e+37
    %v205 = vand.u32 %v193, 2147483648
    %v206 = vor.u32 1.1754944e-38, %v205
    %v207 = vsel %vm204, %v206, %v202
    %v208 = vmul.f32 %v191, %v207
    %v209 = vsel %vm184, %v208, %v181
    %v210 = vrot.slane %v148, 4
    %v211 = vmax.f32 %v148, %v210
    %v212 = vrot.slane %v211, 2
    %v213 = vmax.f32 %v211, %v212
    %v214 = vrot.slane %v213, 1
    %v215 = vmax.f32 %v213, %v214
    %v216 = vsub.f32 %v148, %v215
    %v217 = vmul.f32 %v216, 1.442695
    %v218 = vpow.pop %v217
    %v219 = vrot.slane %v218, 4
    %v220 = vadd.f32 %v218, %v219
    %v221 = vrot.slane %v220, 2
    %v222 = vadd.f32 %v220, %v221
    %v223 = vrot.slane %v222, 1
    %v224 = vadd.f32 %v222, %v223
    %v225 = vrcp.pop %v224
    %v226 = vmul.f32 %v224, %v225
    %v227 = vsub.f32 1.0, %v226
    %v228 = vmul.f32 %v225, %v227
    %v229 = vadd.f32 %v225, %v228
    %vm230 = vweird.f32 %v224
    %vm231 = vweird.f32 %v225
    %vm232 = vmor %vm230, %vm231
    %v233 = vsel %vm232, %v225, %v229
    %v234 = vand.u32 2147483647, %v224
    %vm235 = vcmp.eq.f32.partialorder %v234, 8.507059e+37
    %v236 = vand.u32 %v224, 2147483648
    %v237 = vor.u32 1.1754944e-38, %v236
    %v238 = vsel %vm235, %v237, %v233
    %v239 = vmul.f32 %v218, %v238
    %vm240 = vcmp.eq.s32.totalorder %v151, 7
    %v241 = vsel %vm240, %v239, %v209
    %242 = vst [vmem:[#allocation5] sm:$0xff] %v241
    // Predicated region
    $region18: #{mlp_forward.1} parent=1 // pred_check
      _
    $region19: #{mlp_forward.1} parent=1 // pred_check_branch
      %244 = sbr.rel (0) target = $region21
    $region20: #{mlp_forward.1} parent=1 // pred_region
      %246 = vsyncadd [#allocation4], 0
      %s248 = sshll.u32 [#allocation5], 4
      %s249 = int_to_ptr.vmem [resolvable:$true] %s248
      %s250 = sshll.u32 %s3, 4
      %s251 = int_to_ptr.hbm [resolvable:$true] %s250
      %253 = dma.vmem_to_hbm [thread:$0]  %s249, 128, %s251, [#allocation4]
    $region21: #{mlp_forward.1} parent=1 // pred_fallthru
      _
    // Predicated region
    $region22: #{mlp_forward.1} parent=1 // pred_check
      _
    $region23: #{mlp_forward.1} parent=1 // pred_check_branch
      %255 = sbr.rel (0) target = $region25
    $region24: #{mlp_forward.1} parent=1 // pred_region
      %257 = dma.done [#allocation4], 128
    $region25: #{mlp_forward.1} parent=1 // pred_fallthru
      _
    %258 = vsyncpa [#allocation3], 1
    %259 = vsyncpa [#allocation4], 1

</llo_original>
